<compile_context>
chip_gen: v5e
topology: v5e:2x2
jax: 0.10.0
libtpu: 0.0.40
codegen_flags: <defaults>
</compile_context>

<pallas_src>
import math

import jax
import jax.numpy as jnp
from jax.experimental import pallas as pl
from jax.experimental.pallas import tpu as pltpu


# ------------------------- configs (mirrors the PyTorch `configs`) -------------------------
class Configs:
    enc_in = 4
    d_model = 32
    down_sampling_layers = 2
    down_sampling_window = 2     # stride of the depthwise conv
    down_sampling_c = 0.5        # channel contraction factor
    kernel_size = 3
    dropout = 0.1                # never applied: reference `drop` branch re-applies GELU


def _gelu_exact(v):
    # PyTorch nn.GELU() default (erf-based, exact)
    return 0.5 * v * (1.0 + jax.lax.erf(v * (1.0 / math.sqrt(2.0))))


# --------------- pure-JAX reference pieces (linear stages; also used to build operators) ----
def _caa_pre_act(x, dw, pw, kernel_size, stride):
    """CombinedAntiAlias up to (but not including) the GELUs:
    rfft(ortho) -> anti-alias mask -> irfft(ortho) -> depthwise strided conv -> pointwise conv.
    Linear in x."""
    B, Cin, L = x.shape
    Cout = pw.shape[0]
    icr = min(Cout / Cin, float(kernel_size)) / stride
    xf = jnp.fft.rfft(x, axis=-1, norm="ortho")
    F = xf.shape[-1]
    nyq = int(F * (icr / 2.0))
    keep = (jnp.arange(F) < nyq)[None, None, :]
    xf = jnp.where(keep, xf, jnp.zeros_like(xf))
    xr = jnp.fft.irfft(xf, n=L, axis=-1, norm="ortho").astype(jnp.float32)
    pad = (kernel_size - 1) // 2
    xp = jnp.pad(xr, ((0, 0), (0, 0), (pad, pad)))
    Lout = (L + 2 * pad - kernel_size) // stride + 1
    y = jnp.zeros((B, Cin, Lout), jnp.float32)
    for k in range(kernel_size):
        y = y + dw[None, :, k, None] * xp[:, :, k:k + stride * (Lout - 1) + 1:stride]
    return jnp.einsum("oc,bcl->bol", pw, y, precision=jax.lax.Precision.HIGHEST)


def _joint_interp(down, w_time, target_len):
    """MultiScaleEncoder.joint_interpolation (len_ratio=None). Linear in `down`.
    The reference assigns a complex spectrum into a real buffer, so only the real part
    survives before the final irfft (PyTorch copy_ complex->float semantics)."""
    xf = jnp.fft.rfft(down, axis=-1)                        # norm='backward' (PyTorch default)
    wf = jnp.fft.rfft(w_time, axis=-1, norm="ortho")
    mix = jnp.einsum("bcf,ocf->bof", xf, wf, precision=jax.lax.Precision.HIGHEST)
    Fi = mix.shape[-1]
    Fout = target_len // 2 + 1
    out_fft = jnp.zeros(mix.shape[:2] + (Fout,), jnp.float32)
    out_fft = out_fft.at[..., :Fi].set(jnp.real(mix))
    return jnp.fft.irfft(out_fft, n=target_len, axis=-1).astype(jnp.float32)


def reference_forward(params, x, cfg):
    """Pure-JAX reference of MultiScaleEncoder.forward (used only for correctness check)."""
    mu = jnp.mean(x, -1, keepdims=True)
    var = jnp.mean((x - mu) ** 2, -1, keepdims=True)
    xln = (x - mu) * jax.lax.rsqrt(var + 1e-5) * params["ln_gamma"] + params["ln_beta"]
    current = xln
    pyramid = []
    for i in range(cfg.down_sampling_layers):
        lp = params["layers"][i]
        pre = _caa_pre_act(current, lp["dw"], lp["pw"], cfg.kernel_size, cfg.down_sampling_window)
        down = _gelu_exact(_gelu_exact(pre))     # act, then `drop` branch re-applies act
        pyramid.append(_joint_interp(down, params["weight"][i], cfg.d_model))
        current = down
    w = jax.nn.softmax(params["fusion"], axis=0)
    out = jnp.zeros_like(pyramid[0])
    for i in range(cfg.down_sampling_layers):
        out = out + w[i] * pyramid[i]
    return out


# ------------------------- parameter-prep: fold FFT stages into operators -------------------
def build_operators(params, cfg):
    """Fold every linear stage (DFT, anti-alias mask, inverse DFT, strided depthwise conv,
    pointwise conv, spectral channel mix, zero-pad, irfft) into per-layer dense operators:
      D_i: (C_i, L_i, C_{i+1}*L_{i+1})   -- CombinedAntiAlias pre-GELU, per input channel
      T_i: (C_{i+1}*L_{i+1}, enc_in*d_model) -- joint_interpolation, flattened & lane-dense
    # TODO(synk): rfft/irfft have no Pallas primitive; they appear only here, at parameter-prep
    # time, to build these small DFT-derived operator matrices (applied as matmuls in-kernel).
    """
    D_ops, T_ops = [], []
    cin, lin = cfg.enc_in, cfg.d_model
    for i in range(cfg.down_sampling_layers):
        dw = params["layers"][i]["dw"]
        pw = params["layers"][i]["pw"]
        w_time = params["weight"][i]
        cout = pw.shape[0]
        lout = lin // cfg.down_sampling_window

        def caa_flat(e, dw=dw, pw=pw, cin=cin, lin=lin):
            return _caa_pre_act(e.reshape(1, cin, lin), dw, pw,
                                cfg.kernel_size, cfg.down_sampling_window).reshape(-1)

        Dflat = jax.vmap(caa_flat)(jnp.eye(cin * lin, dtype=jnp.float32))   # (cin*lin, cout*lout)
        D_ops.append(Dflat.reshape(cin, lin, cout * lout).astype(jnp.float32))

        def ji_flat(e, w=w_time, cout=cout, lout=lout):
            return _joint_interp(e.reshape(1, cout, lout), w, cfg.d_model).reshape(-1)

        T_ops.append(jax.vmap(ji_flat)(jnp.eye(cout * lout, dtype=jnp.float32)).astype(jnp.float32))

        cin, lin = cout, lout
    return D_ops, T_ops


# ------------------------- the single fused Pallas kernel -----------------------------------
def make_fused_forward(params, cfg):
    num_layers = cfg.down_sampling_layers
    chans = [cfg.enc_in]
    lens = [cfg.d_model]
    for i in range(num_layers):
        chans.append(params["layers"][i]["pw"].shape[0])
        lens.append(lens[-1] // cfg.down_sampling_window)

    D_ops, T_ops = build_operators(params, cfg)
    gamma = params["ln_gamma"].reshape(1, 1, cfg.d_model).astype(jnp.float32)
    beta = params["ln_beta"].reshape(1, 1, cfg.d_model).astype(jnp.float32)
    # softmax of the fusion parameter is precomputed host/XLA-side (2 elements)
    fuse_w = jax.nn.softmax(params["fusion"], axis=0).astype(jnp.float32)

    def kernel(x_ref, g_ref, b_ref, *refs):
        op_refs = refs[:2 * num_layers]          # D0, T0, D1, T1, ... (VMEM)
        w_ref = refs[2 * num_layers]             # (num_layers,) softmaxed fusion weights (SMEM)
        o_ref = refs[2 * num_layers + 1]         # (B, enc_in*d_model) output (VMEM, lane-dense)

        # LayerNorm over d_model (last axis); rsqrt/erf ride the EUP slot, f32 throughout.
        x = x_ref[...]
        mu = jnp.mean(x, axis=-1, keepdims=True)
        var = jnp.mean((x - mu) ** 2, axis=-1, keepdims=True)
        xln = (x - mu) * jax.lax.rsqrt(var + 1e-5) * g_ref[...] + b_ref[...]

        bsz = x.shape[0]
        cur_flat = None                          # flattened (B, C_i*L_i) activation
        out = None
        for i in range(num_layers):              # static unroll (2 layers)
            d_ref = op_refs[2 * i]               # (C_i, L_i, C_{i+1}*L_{i+1})
            t_ref = op_refs[2 * i + 1]           # (C_{i+1}*L_{i+1}, enc_in*d_model)
            cin, lin = chans[i], lens[i]
            mout = d_ref.shape[2]

            # anti-alias + strided depthwise + pointwise conv == one folded matmul per channel
            # (for larger C/d_model these jnp.dot contractions feed the MXU; cast to bf16 with
            #  f32 accumulation on v6e/v7x if the model is scaled up).
            pre = jnp.zeros((bsz, mout), jnp.float32)
            for c in range(cin):                 # static unroll (<= enc_in)
                xc = xln[:, c, :] if i == 0 else cur_flat[:, c * lin:(c + 1) * lin]
                pre = pre + jnp.dot(xc, d_ref[c], preferred_element_type=jnp.float32)
            down = _gelu_exact(_gelu_exact(pre))  # act, then `drop` branch re-applies act

            # joint_interpolation (rfft -> spectral mix -> real part -> zero-pad -> irfft),
            # folded into one matmul producing a lane-dense (B, 128) slab.
            fused_i = jnp.dot(down, t_ref[...], preferred_element_type=jnp.float32)
            term = fused_i * w_ref[i]            # scalar from SMEM
            out = term if out is None else out + term
            cur_flat = down
        o_ref[...] = out

    vmem = pl.BlockSpec(memory_space=pltpu.MemorySpace.VMEM)
    smem = pl.BlockSpec(memory_space=pltpu.MemorySpace.SMEM)

    ops_interleaved = []
    for i in range(num_layers):
        ops_interleaved += [D_ops[i], T_ops[i]]

    def forward(x):
        bsz = x.shape[0]
        out_flat = pl.pallas_call(
            kernel,
            out_shape=jax.ShapeDtypeStruct((bsz, cfg.enc_in * cfg.d_model), jnp.float32),
            in_specs=[vmem, vmem, vmem] + [vmem] * (2 * num_layers) + [smem],
            out_specs=vmem,
            compiler_params=pltpu.CompilerParams(vmem_limit_bytes=32 * 1024 * 1024),
        )(x, gamma, beta, *ops_interleaved, fuse_w)
        return out_flat.reshape(bsz, cfg.enc_in, cfg.d_model)

    return jax.jit(forward)


# ------------------------- parameter init (matches module structure) ------------------------
def init_params(cfg, key):
    n_keys = 3 * cfg.down_sampling_layers
    keys = jax.random.split(key, n_keys)
    params = {
        "ln_gamma": jnp.ones((cfg.d_model,), jnp.float32),   # LayerNorm default init
        "ln_beta": jnp.zeros((cfg.d_model,), jnp.float32),
        "layers": [],
        "weight": [],
        "fusion": jnp.ones((cfg.down_sampling_layers,), jnp.float32),
    }
    ki = 0
    cur = cfg.enc_in
    for _ in range(cfg.down_sampling_layers):
        cout = max(1, int(cur * cfg.down_sampling_c))
        dw = 0.1 * jax.random.normal(keys[ki], (cur, cfg.kernel_size), jnp.float32); ki += 1
        pw = 0.1 * jax.random.normal(keys[ki], (cout, cur), jnp.float32); ki += 1
        params["layers"].append({"dw": dw, "pw": pw})
        cur = cout
    for j in range(1, cfg.down_sampling_layers + 1):
        cj = max(1, int(cfg.enc_in * cfg.down_sampling_c ** j))
        fl = cfg.d_model // cfg.down_sampling_window ** j
        params["weight"].append(
            0.02 * jax.random.normal(keys[ki], (cfg.enc_in, cj, fl), jnp.float32)
        ); ki += 1
    return params


if __name__ == "__main__":
    cfg = Configs()
    key = jax.random.PRNGKey(0)
    pkey, xkey = jax.random.split(key)
    params = init_params(cfg, pkey)
    x = jax.random.normal(xkey, (2, cfg.enc_in, cfg.d_model), jnp.float32)

    forward = make_fused_forward(params, cfg)
    out = jax.block_until_ready(forward(x))

    assert out.shape == (2, cfg.enc_in, cfg.d_model)
    assert out.dtype == jnp.float32

    # verify against the pure-JAX reference of the module
    ref = reference_forward(params, x, cfg)
    err = float(jnp.max(jnp.abs(out - ref)))
    assert jnp.allclose(out, ref, rtol=1e-3, atol=1e-5), f"max abs err {err}"

    print("KERNEL_OK")
</pallas_src>

<mosaic_0001>
module attributes {stable_mosaic.version = 11 : i64} {
  func.func @kernel(%arg0: memref<2x4x32xf32, #tpu.memory_space<vmem>>, %arg1: memref<1x1x32xf32, #tpu.memory_space<vmem>>, %arg2: memref<1x1x32xf32, #tpu.memory_space<vmem>>, %arg3: memref<4x32x32xf32, #tpu.memory_space<vmem>>, %arg4: memref<32x128xf32, #tpu.memory_space<vmem>>, %arg5: memref<2x16x8xf32, #tpu.memory_space<vmem>>, %arg6: memref<8x128xf32, #tpu.memory_space<vmem>>, %arg7: memref<2xf32, #tpu.memory_space<smem>>, %arg8: memref<2x128xf32, #tpu.memory_space<vmem>>) attributes {dimension_semantics = [], scalar_prefetch = 0 : i64, scratch_operands = 0 : i64, tpu.core_type = #tpu.core_type<tc>} {
    %c0 = arith.constant 0 : index
    %c0_0 = arith.constant 0 : index
    %c0_1 = arith.constant 0 : index
    %0 = vector.load %arg0[%c0, %c0_0, %c0_1] : memref<2x4x32xf32, #tpu.memory_space<vmem>>, vector<2x4x32xf32>
    %cst = arith.constant dense<0.000000e+00> : vector<2x4xf32>
    %1 = vector.multi_reduction <add>, %0, %cst [2] : vector<2x4x32xf32> to vector<2x4xf32>
    %2 = vector.shape_cast %1 : vector<2x4xf32> to vector<2x4x1xf32>
    %cst_2 = arith.constant 3.200000e+01 : f32
    %3 = vector.broadcast %cst_2 : f32 to vector<2x4x1xf32>
    %4 = arith.divf %2, %3 : vector<2x4x1xf32>
    %5 = vector.broadcast %4 : vector<2x4x1xf32> to vector<2x4x32xf32>
    %6 = arith.subf %0, %5 : vector<2x4x32xf32>
    %7 = arith.mulf %6, %6 : vector<2x4x32xf32>
    %cst_3 = arith.constant dense<0.000000e+00> : vector<2x4xf32>
    %8 = vector.multi_reduction <add>, %7, %cst_3 [2] : vector<2x4x32xf32> to vector<2x4xf32>
    %9 = vector.shape_cast %8 : vector<2x4xf32> to vector<2x4x1xf32>
    %cst_4 = arith.constant 3.200000e+01 : f32
    %10 = vector.broadcast %cst_4 : f32 to vector<2x4x1xf32>
    %11 = arith.divf %9, %10 : vector<2x4x1xf32>
    %12 = vector.broadcast %4 : vector<2x4x1xf32> to vector<2x4x32xf32>
    %13 = arith.subf %0, %12 : vector<2x4x32xf32>
    %cst_5 = arith.constant 9.99999974E-6 : f32
    %14 = vector.broadcast %cst_5 : f32 to vector<2x4x1xf32>
    %15 = arith.addf %11, %14 : vector<2x4x1xf32>
    %16 = math.rsqrt %15 : vector<2x4x1xf32>
    %17 = vector.broadcast %16 : vector<2x4x1xf32> to vector<2x4x32xf32>
    %18 = arith.mulf %13, %17 : vector<2x4x32xf32>
    %c0_6 = arith.constant 0 : index
    %c0_7 = arith.constant 0 : index
    %c0_8 = arith.constant 0 : index
    %19 = vector.load %arg1[%c0_6, %c0_7, %c0_8] : memref<1x1x32xf32, #tpu.memory_space<vmem>>, vector<1x1x32xf32>
    %20 = vector.broadcast %19 : vector<1x1x32xf32> to vector<2x4x32xf32>
    %21 = arith.mulf %18, %20 : vector<2x4x32xf32>
    %c0_9 = arith.constant 0 : index
    %c0_10 = arith.constant 0 : index
    %c0_11 = arith.constant 0 : index
    %22 = vector.load %arg2[%c0_9, %c0_10, %c0_11] : memref<1x1x32xf32, #tpu.memory_space<vmem>>, vector<1x1x32xf32>
    %23 = vector.broadcast %22 : vector<1x1x32xf32> to vector<2x4x32xf32>
    %24 = arith.addf %21, %23 : vector<2x4x32xf32>
    %cst_12 = arith.constant 0.000000e+00 : f32
    %25 = vector.broadcast %cst_12 : f32 to vector<2x32xf32>
    %26 = vector.extract_strided_slice %24 {offsets = [0, 0, 0], sizes = [2, 1, 32], strides = [1, 1, 1]} : vector<2x4x32xf32> to vector<2x1x32xf32>
    %27 = vector.shape_cast %26 : vector<2x1x32xf32> to vector<2x32xf32>
    %c0_13 = arith.constant 0 : index
    %c0_14 = arith.constant 0 : index
    %c0_15 = arith.constant 0 : index
    %28 = vector.load %arg3[%c0_13, %c0_14, %c0_15] : memref<4x32x32xf32, #tpu.memory_space<vmem>>, vector<1x32x32xf32>
    %29 = vector.shape_cast %28 : vector<1x32x32xf32> to vector<32x32xf32>
    %cst_16 = arith.constant dense<0.000000e+00> : vector<2x32xf32>
    %30 = tpu.matmul %27, %29, %cst_16 {dimension_numbers = #tpu.dot_dimension_numbers<[1], [0], [0], [1], [0, 0, 1, 1], [], []>} : vector<2x32xf32>, vector<32x32xf32>, vector<2x32xf32> -> vector<2x32xf32>
    %31 = arith.addf %25, %30 : vector<2x32xf32>
    %32 = vector.extract_strided_slice %24 {offsets = [0, 1, 0], sizes = [2, 1, 32], strides = [1, 1, 1]} : vector<2x4x32xf32> to vector<2x1x32xf32>
    %33 = vector.shape_cast %32 : vector<2x1x32xf32> to vector<2x32xf32>
    %c1 = arith.constant 1 : index
    %c0_17 = arith.constant 0 : index
    %c0_18 = arith.constant 0 : index
    %34 = vector.load %arg3[%c1, %c0_17, %c0_18] : memref<4x32x32xf32, #tpu.memory_space<vmem>>, vector<1x32x32xf32>
    %35 = vector.shape_cast %34 : vector<1x32x32xf32> to vector<32x32xf32>
    %cst_19 = arith.constant dense<0.000000e+00> : vector<2x32xf32>
    %36 = tpu.matmul %33, %35, %cst_19 {dimension_numbers = #tpu.dot_dimension_numbers<[1], [0], [0], [1], [0, 0, 1, 1], [], []>} : vector<2x32xf32>, vector<32x32xf32>, vector<2x32xf32> -> vector<2x32xf32>
    %37 = arith.addf %31, %36 : vector<2x32xf32>
    %38 = vector.extract_strided_slice %24 {offsets = [0, 2, 0], sizes = [2, 1, 32], strides = [1, 1, 1]} : vector<2x4x32xf32> to vector<2x1x32xf32>
    %39 = vector.shape_cast %38 : vector<2x1x32xf32> to vector<2x32xf32>
    %c2 = arith.constant 2 : index
    %c0_20 = arith.constant 0 : index
    %c0_21 = arith.constant 0 : index
    %40 = vector.load %arg3[%c2, %c0_20, %c0_21] : memref<4x32x32xf32, #tpu.memory_space<vmem>>, vector<1x32x32xf32>
    %41 = vector.shape_cast %40 : vector<1x32x32xf32> to vector<32x32xf32>
    %cst_22 = arith.constant dense<0.000000e+00> : vector<2x32xf32>
    %42 = tpu.matmul %39, %41, %cst_22 {dimension_numbers = #tpu.dot_dimension_numbers<[1], [0], [0], [1], [0, 0, 1, 1], [], []>} : vector<2x32xf32>, vector<32x32xf32>, vector<2x32xf32> -> vector<2x32xf32>
    %43 = arith.addf %37, %42 : vector<2x32xf32>
    %44 = vector.extract_strided_slice %24 {offsets = [0, 3, 0], sizes = [2, 1, 32], strides = [1, 1, 1]} : vector<2x4x32xf32> to vector<2x1x32xf32>
    %45 = vector.shape_cast %44 : vector<2x1x32xf32> to vector<2x32xf32>
    %c3 = arith.constant 3 : index
    %c0_23 = arith.constant 0 : index
    %c0_24 = arith.constant 0 : index
    %46 = vector.load %arg3[%c3, %c0_23, %c0_24] : memref<4x32x32xf32, #tpu.memory_space<vmem>>, vector<1x32x32xf32>
    %47 = vector.shape_cast %46 : vector<1x32x32xf32> to vector<32x32xf32>
    %cst_25 = arith.constant dense<0.000000e+00> : vector<2x32xf32>
    %48 = tpu.matmul %45, %47, %cst_25 {dimension_numbers = #tpu.dot_dimension_numbers<[1], [0], [0], [1], [0, 0, 1, 1], [], []>} : vector<2x32xf32>, vector<32x32xf32>, vector<2x32xf32> -> vector<2x32xf32>
    %49 = arith.addf %43, %48 : vector<2x32xf32>
    %cst_26 = arith.constant 5.000000e-01 : f32
    %50 = vector.broadcast %cst_26 : f32 to vector<2x32xf32>
    %51 = arith.mulf %50, %49 : vector<2x32xf32>
    %cst_27 = arith.constant 0.707106769 : f32
    %52 = vector.broadcast %cst_27 : f32 to vector<2x32xf32>
    %53 = arith.mulf %49, %52 : vector<2x32xf32>
    %54 = math.erf %53 : vector<2x32xf32>
    %cst_28 = arith.constant 1.000000e+00 : f32
    %55 = vector.broadcast %cst_28 : f32 to vector<2x32xf32>
    %56 = arith.addf %55, %54 : vector<2x32xf32>
    %57 = arith.mulf %51, %56 : vector<2x32xf32>
    %cst_29 = arith.constant 5.000000e-01 : f32
    %58 = vector.broadcast %cst_29 : f32 to vector<2x32xf32>
    %59 = arith.mulf %58, %57 : vector<2x32xf32>
    %cst_30 = arith.constant 0.707106769 : f32
    %60 = vector.broadcast %cst_30 : f32 to vector<2x32xf32>
    %61 = arith.mulf %57, %60 : vector<2x32xf32>
    %62 = math.erf %61 : vector<2x32xf32>
    %cst_31 = arith.constant 1.000000e+00 : f32
    %63 = vector.broadcast %cst_31 : f32 to vector<2x32xf32>
    %64 = arith.addf %63, %62 : vector<2x32xf32>
    %65 = arith.mulf %59, %64 : vector<2x32xf32>
    %c0_32 = arith.constant 0 : index
    %c0_33 = arith.constant 0 : index
    %66 = vector.load %arg4[%c0_32, %c0_33] : memref<32x128xf32, #tpu.memory_space<vmem>>, vector<32x128xf32>
    %cst_34 = arith.constant dense<0.000000e+00> : vector<2x128xf32>
    %67 = tpu.matmul %65, %66, %cst_34 {dimension_numbers = #tpu.dot_dimension_numbers<[1], [0], [0], [1], [0, 0, 1, 1], [], []>} : vector<2x32xf32>, vector<32x128xf32>, vector<2x128xf32> -> vector<2x128xf32>
    %c0_35 = arith.constant 0 : index
    %68 = memref.load %arg7[%c0_35] : memref<2xf32, #tpu.memory_space<smem>>
    %69 = vector.broadcast %68 : f32 to vector<2x128xf32>
    %70 = arith.mulf %67, %69 : vector<2x128xf32>
    %cst_36 = arith.constant 0.000000e+00 : f32
    %71 = vector.broadcast %cst_36 : f32 to vector<2x8xf32>
    %72 = vector.extract_strided_slice %65 {offsets = [0, 0], sizes = [2, 16], strides = [1, 1]} : vector<2x32xf32> to vector<2x16xf32>
    %c0_37 = arith.constant 0 : index
    %c0_38 = arith.constant 0 : index
    %c0_39 = arith.constant 0 : index
    %73 = vector.load %arg5[%c0_37, %c0_38, %c0_39] : memref<2x16x8xf32, #tpu.memory_space<vmem>>, vector<1x16x8xf32>
    %74 = vector.shape_cast %73 : vector<1x16x8xf32> to vector<16x8xf32>
    %cst_40 = arith.constant dense<0.000000e+00> : vector<2x8xf32>
    %75 = tpu.matmul %72, %74, %cst_40 {dimension_numbers = #tpu.dot_dimension_numbers<[1], [0], [0], [1], [0, 0, 1, 1], [], []>} : vector<2x16xf32>, vector<16x8xf32>, vector<2x8xf32> -> vector<2x8xf32>
    %76 = arith.addf %71, %75 : vector<2x8xf32>
    %77 = vector.extract_strided_slice %65 {offsets = [0, 16], sizes = [2, 16], strides = [1, 1]} : vector<2x32xf32> to vector<2x16xf32>
    %c1_41 = arith.constant 1 : index
    %c0_42 = arith.constant 0 : index
    %c0_43 = arith.constant 0 : index
    %78 = vector.load %arg5[%c1_41, %c0_42, %c0_43] : memref<2x16x8xf32, #tpu.memory_space<vmem>>, vector<1x16x8xf32>
    %79 = vector.shape_cast %78 : vector<1x16x8xf32> to vector<16x8xf32>
    %cst_44 = arith.constant dense<0.000000e+00> : vector<2x8xf32>
    %80 = tpu.matmul %77, %79, %cst_44 {dimension_numbers = #tpu.dot_dimension_numbers<[1], [0], [0], [1], [0, 0, 1, 1], [], []>} : vector<2x16xf32>, vector<16x8xf32>, vector<2x8xf32> -> vector<2x8xf32>
    %81 = arith.addf %76, %80 : vector<2x8xf32>
    %cst_45 = arith.constant 5.000000e-01 : f32
    %82 = vector.broadcast %cst_45 : f32 to vector<2x8xf32>
    %83 = arith.mulf %82, %81 : vector<2x8xf32>
    %cst_46 = arith.constant 0.707106769 : f32
    %84 = vector.broadcast %cst_46 : f32 to vector<2x8xf32>
    %85 = arith.mulf %81, %84 : vector<2x8xf32>
    %86 = math.erf %85 : vector<2x8xf32>
    %cst_47 = arith.constant 1.000000e+00 : f32
    %87 = vector.broadcast %cst_47 : f32 to vector<2x8xf32>
    %88 = arith.addf %87, %86 : vector<2x8xf32>
    %89 = arith.mulf %83, %88 : vector<2x8xf32>
    %cst_48 = arith.constant 5.000000e-01 : f32
    %90 = vector.broadcast %cst_48 : f32 to vector<2x8xf32>
    %91 = arith.mulf %90, %89 : vector<2x8xf32>
    %cst_49 = arith.constant 0.707106769 : f32
    %92 = vector.broadcast %cst_49 : f32 to vector<2x8xf32>
    %93 = arith.mulf %89, %92 : vector<2x8xf32>
    %94 = math.erf %93 : vector<2x8xf32>
    %cst_50 = arith.constant 1.000000e+00 : f32
    %95 = vector.broadcast %cst_50 : f32 to vector<2x8xf32>
    %96 = arith.addf %95, %94 : vector<2x8xf32>
    %97 = arith.mulf %91, %96 : vector<2x8xf32>
    %c0_51 = arith.constant 0 : index
    %c0_52 = arith.constant 0 : index
    %98 = vector.load %arg6[%c0_51, %c0_52] : memref<8x128xf32, #tpu.memory_space<vmem>>, vector<8x128xf32>
    %cst_53 = arith.constant dense<0.000000e+00> : vector<2x128xf32>
    %99 = tpu.matmul %97, %98, %cst_53 {dimension_numbers = #tpu.dot_dimension_numbers<[1], [0], [0], [1], [0, 0, 1, 1], [], []>} : vector<2x8xf32>, vector<8x128xf32>, vector<2x128xf32> -> vector<2x128xf32>
    %c1_54 = arith.constant 1 : index
    %100 = memref.load %arg7[%c1_54] : memref<2xf32, #tpu.memory_space<smem>>
    %101 = vector.broadcast %100 : f32 to vector<2x128xf32>
    %102 = arith.mulf %99, %101 : vector<2x128xf32>
    %103 = arith.addf %70, %102 : vector<2x128xf32>
    %c0_55 = arith.constant 0 : index
    %c0_56 = arith.constant 0 : index
    %104 = vector.load %arg8[%c0_55, %c0_56] : memref<2x128xf32, #tpu.memory_space<vmem>>, vector<2x128xf32>
    tpu.vector_store %arg8[%c0_55, %c0_56], %103 {strides = array<i32>} : memref<2x128xf32, #tpu.memory_space<vmem>>, vector<2x128xf32>,
    return
  }
}

</mosaic_0001>

<llo_original>
// kernel: forward.1
$region0: #{forward.1}
  #allocation0 [shape = 'u32[]', space=smem, size = 0x4, offset = 0x4, fixed_abs, tag = 'smem constant byte address 0x4 - core index']
  #allocation1 [shape = 'u32[72,128]{1,0:T(1,128)}', space=vmem, size = 0x9000, scoped, tag = 'internal scratch']
  %s0 = inlined_call_operand.hbm [shape: f32[2,4,32], index: 0, kind: input, shape index: {}]
  %s1 = inlined_call_operand.vmem [shape: f32[1,1,32], index: 1, kind: input, shape index: {}]
  %s2 = inlined_call_operand.vmem [shape: f32[1,1,32], index: 2, kind: input, shape index: {}]
  %s3 = inlined_call_operand.hbm [shape: f32[4,32,32], index: 3, kind: input, shape index: {}]
  %s4 = inlined_call_operand.hbm [shape: f32[32,128], index: 4, kind: input, shape index: {}]
  %s5 = inlined_call_operand.hbm [shape: f32[2,16,8], index: 5, kind: input, shape index: {}]
  %s6 = inlined_call_operand.vmem [shape: f32[8,128], index: 6, kind: input, shape index: {}]
  %s7 = inlined_call_operand.vmem [shape: f32[2], index: 7, kind: input, shape index: {}]
  %s8 = inlined_call_operand.vmem [shape: f32[2,128], index: 8, kind: output, shape index: {}]
  %s9 = sld [smem:[#allocation0]]
  $region62: #{forward.1} parent=0
    _
  %s11 = ssub.s32 1, %s9
  %s12 = scalar_select 0, %s11, %s9
  $region1: #{forward.1} parent=0
    #allocation2 [shape = 'u8[4096]{0}', space=vmem, size = 0x1000, scoped, tag = 'input window, operand 0, single buffered']
    #allocation3 [shape = 's32[1]{0}', space=sflag, size = 0x4, scoped, tag = 'scoped memory for forward.1']
    #allocation4 [shape = 's32[1]{0}', space=sflag, size = 0x4, scoped, tag = 'scoped memory for forward.1']
    #allocation5 [shape = 'u8[65536]{0}', space=vmem, size = 0x10000, scoped, tag = 'input window, operand 3, single buffered']
    #allocation6 [shape = 's32[1]{0}', space=sflag, size = 0x4, scoped, tag = 'scoped memory for forward.1']
    #allocation7 [shape = 'u8[16384]{0}', space=vmem, size = 0x4000, scoped, tag = 'input window, operand 4, single buffered']
    #allocation8 [shape = 'u8[16384]{0}', space=vmem, size = 0x4000, scoped, tag = 'input window, operand 5, single buffered']
    #allocation9 [shape = 's32[1]{0}', space=sflag, size = 0x4, scoped, tag = 'scoped memory for forward.1']
    #allocation10 [shape = 'u8[512]{0}', space=smem, size = 0x200, scoped, tag = 'input window, operand 7, single buffered']
    %13 = vsyncpa [#allocation3], 0
    %14 = vsyncpa [#allocation6], 0
    %15 = vsyncpa [#allocation9], 0
    %16 = vsyncpa [#allocation4], 0
    // Predicated region
    $region2: #{forward.1} parent=1 // pred_check
      _
    $region3: #{forward.1} parent=1 // pred_check_branch
      %18 = sbr.rel (0) target = $region5
    $region4: #{forward.1} parent=1 // pred_region
      %20 = vsyncadd [#allocation3], 0
      %s21 = sshll.u32 %s0, 4
      %s22 = int_to_ptr.hbm [resolvable:$true] %s21
      %s23 = sshll.u32 [#allocation2], 4
      %s24 = int_to_ptr.vmem [resolvable:$true] %s23
      %29 = dma.hbm_to_vmem [thread:$0]  %s22, 128, %s24, [#allocation3], 64, 64, 4
    $region5: #{forward.1} parent=1 // pred_fallthru
      _
    // Predicated region
    $region6: #{forward.1} parent=1 // pred_check
      _
    $region7: #{forward.1} parent=1 // pred_check_branch
      %31 = sbr.rel (0) target = $region9
    $region8: #{forward.1} parent=1 // pred_region
      _
    $region9: #{forward.1} parent=1 // pred_fallthru
      _
    // Predicated region
    $region10: #{forward.1} parent=1 // pred_check
      _
    $region11: #{forward.1} parent=1 // pred_check_branch
      %33 = sbr.rel (0) target = $region13
    $region12: #{forward.1} parent=1 // pred_region
      _
    $region13: #{forward.1} parent=1 // pred_fallthru
      _
    // Predicated region
    $region14: #{forward.1} parent=1 // pred_check
      _
    $region15: #{forward.1} parent=1 // pred_check_branch
      %35 = sbr.rel (0) target = $region17
    $region16: #{forward.1} parent=1 // pred_region
      %37 = vsyncadd [#allocation6], 0
      %s38 = sshll.u32 %s3, 4
      %s39 = int_to_ptr.hbm [resolvable:$true] %s38
      %s40 = sshll.u32 [#allocation5], 4
      %s41 = int_to_ptr.vmem [resolvable:$true] %s40
      %46 = dma.hbm_to_vmem [thread:$0]  %s39, 2048, %s41, [#allocation6], 128, 128, 8
    $region17: #{forward.1} parent=1 // pred_fallthru
      _
    // Predicated region
    $region18: #{forward.1} parent=1 // pred_check
      _
    $region19: #{forward.1} parent=1 // pred_check_branch
      %48 = sbr.rel (0) target = $region21
    $region20: #{forward.1} parent=1 // pred_region
      %50 = vsyncadd [#allocation6], 0
      %s51 = sshll.u32 %s4, 4
      %s52 = int_to_ptr.hbm [resolvable:$true] %s51
      %s53 = sshll.u32 [#allocation7], 4
      %s54 = int_to_ptr.vmem [resolvable:$true] %s53
      %59 = dma.hbm_to_vmem [thread:$0]  %s52, 512, %s54, [#allocation6], 128, 128, 8
    $region21: #{forward.1} parent=1 // pred_fallthru
      _
    // Predicated region
    $region22: #{forward.1} parent=1 // pred_check
      _
    $region23: #{forward.1} parent=1 // pred_check_branch
      %61 = sbr.rel (0) target = $region25
    $region24: #{forward.1} parent=1 // pred_region
      %63 = vsyncadd [#allocation9], 0
      %s64 = sshll.u32 %s5, 4
      %s65 = int_to_ptr.hbm [resolvable:$true] %s64
      %s66 = sshll.u32 [#allocation8], 4
      %s67 = int_to_ptr.vmem [resolvable:$true] %s66
      %72 = dma.hbm_to_vmem [thread:$0]  %s65, 512, %s67, [#allocation9], 128, 128, 8
    $region25: #{forward.1} parent=1 // pred_fallthru
      _
    // Predicated region
    $region26: #{forward.1} parent=1 // pred_check
      _
    $region27: #{forward.1} parent=1 // pred_check_branch
      %74 = sbr.rel (0) target = $region29
    $region28: #{forward.1} parent=1 // pred_region
      _
    $region29: #{forward.1} parent=1 // pred_fallthru
      _
    // Predicated region
    $region30: #{forward.1} parent=1 // pred_check
      _
    $region31: #{forward.1} parent=1 // pred_check_branch
      %76 = sbr.rel (0) target = $region33
    $region32: #{forward.1} parent=1 // pred_region
      %78 = vsyncadd [#allocation4], 0
      %s80 = sshll.u32 %s7, 4
      %s81 = int_to_ptr.vmem [resolvable:$true] %s80
      %83 = dma.vmem_to_smem %s81, 16, [#allocation10], [#allocation4]
    $region33: #{forward.1} parent=1 // pred_fallthru
      _
    // Predicated region
    $region34: #{forward.1} parent=1 // pred_check
      _
    $region35: #{forward.1} parent=1 // pred_check_branch
      %85 = sbr.rel (0) target = $region37
    $region36: #{forward.1} parent=1 // pred_region
      %87 = dma.done [#allocation3], 128
    $region37: #{forward.1} parent=1 // pred_fallthru
      _
    // Predicated region
    $region38: #{forward.1} parent=1 // pred_check
      _
    $region39: #{forward.1} parent=1 // pred_check_branch
      %89 = sbr.rel (0) target = $region41
    $region40: #{forward.1} parent=1 // pred_region
      %91 = dma.done [#allocation6], 2048
    $region41: #{forward.1} parent=1 // pred_fallthru
      _
    // Predicated region
    $region42: #{forward.1} parent=1 // pred_check
      _
    $region43: #{forward.1} parent=1 // pred_check_branch
      %93 = sbr.rel (0) target = $region45
    $region44: #{forward.1} parent=1 // pred_region
      %95 = dma.done [#allocation6], 512
    $region45: #{forward.1} parent=1 // pred_fallthru
      _
    // Predicated region
    $region46: #{forward.1} parent=1 // pred_check
      _
    $region47: #{forward.1} parent=1 // pred_check_branch
      %97 = sbr.rel (0) target = $region49
    $region48: #{forward.1} parent=1 // pred_region
      %99 = dma.done [#allocation9], 512
    $region49: #{forward.1} parent=1 // pred_fallthru
      _
    // Predicated region
    $region50: #{forward.1} parent=1 // pred_check
      _
    $region51: #{forward.1} parent=1 // pred_check_branch
      %101 = sbr.rel (0) target = $region53
    $region52: #{forward.1} parent=1 // pred_region
      %103 = dma.done [#allocation4], 16
    $region53: #{forward.1} parent=1 // pred_fallthru
      _
    %104 = sfence
    %v105 = vld [vmem:[#allocation2] sm:$0xf]
    %v106 = vld [vmem:[#allocation2 + $0x4] sm:$0xf]
    %vm107 = vcmask 257024
    %v108 = vsel %vm107, %v105, 0.0
    %109 = vadd.xlane.f32.xlu0 %v108
    %v110 = vpop.xlane.xlu0 %109
    %v111 = vsel %vm107, %v106, 0.0
    %112 = vadd.xlane.f32.xlu0 %v111
    %v113 = vpop.xlane.xlu0 %112
    %v114 = vrcp.pop 32.0
    %v115 = vmul.f32 32.0, %v114
    %v116 = vsub.f32 1.0, %v115
    %v117 = vmul.f32 %v114, %v116
    %v118 = vadd.f32 %v114, %v117
    %vm119 = vweird.f32 %v114
    %v120 = vsel %vm119, %v114, %v118
    %v121 = vmul.f32 %v110, %v120
    %v122 = vmul.f32 %v113, %v120
    %v123 = vsub.f32 %v105, %v121
    %v124 = vsub.f32 %v106, %v122
    %v125 = vmul.f32 %v123, %v123
    %v126 = vmul.f32 %v124, %v124
    %v127 = vsel %vm107, %v125, 0.0
    %128 = vadd.xlane.f32.xlu0 %v127
    %v129 = vpop.xlane.xlu0 %128
    %v130 = vsel %vm107, %v126, 0.0
    %131 = vadd.xlane.f32.xlu0 %v130
    %v132 = vpop.xlane.xlu0 %131
    %v133 = vmul.f32 %v129, %v120
    %v134 = vmul.f32 %v132, %v120
    %v135 = vadd.f32 %v133, 1e-05
    %v136 = vadd.f32 %v134, 1e-05
    %v137 = vrsqrt.pop %v135
    %v138 = vmul.f32 %v137, %v135
    %v139 = vmul.f32 %v138, %v137
    %v140 = vmul.f32 0.5, %v139
    %v141 = vsub.f32 1.5, %v140
    %v142 = vmul.f32 %v137, %v141
    %vm143 = vweird.f32 %v135
    %vm144 = vweird.f32 %v137
    %vm145 = vmor %vm143, %vm144
    %v146 = vsel %vm145, %v137, %v142
    %v147 = vrsqrt.pop %v136
    %v148 = vmul.f32 %v147, %v136
    %v149 = vmul.f32 %v148, %v147
    %v150 = vmul.f32 0.5, %v149
    %v151 = vsub.f32 1.5, %v150
    %v152 = vmul.f32 %v147, %v151
    %vm153 = vweird.f32 %v136
    %vm154 = vweird.f32 %v147
    %vm155 = vmor %vm153, %vm154
    %v156 = vsel %vm155, %v147, %v152
    %v157 = vmul.f32 %v123, %v146
    %v158 = vmul.f32 %v124, %v156
    %v159 = vld [vmem:[%s1] sm:$0x1]
    %v161 = vperm.slane %v159, 0
    %v163 = vmul.f32 %v157, %v161
    %v164 = vmul.f32 %v158, %v161
    %v165 = vld [vmem:[%s2] sm:$0x1]
    %v167 = vperm.slane %v165, 0
    %v169 = vadd.f32 %v163, %v167
    %v170 = vadd.f32 %v164, %v167
    %v171 = vld [vmem:[#allocation5] sm:$0xff]
    %v172 = vld [vmem:[#allocation5 + $0x8] sm:$0xff]
    %v173 = vld [vmem:[#allocation5 + $0x10] sm:$0xff]
    %v174 = vld [vmem:[#allocation5 + $0x18] sm:$0xff]
    %s175 = scalar_lea.vmem [#allocation5], 32
    %v176 = vld [vmem:[%s175] sm:$0xff]
    %v177 = vld [vmem:[%s175 + $0x8] sm:$0xff]
    %v178 = vld [vmem:[%s175 + $0x10] sm:$0xff]
    %v179 = vld [vmem:[%s175 + $0x18] sm:$0xff]
    %v182 = vrot.slane %v169, 1
    %vm183 = vcmask 1041409
    %v184 = vsel %vm183, %v170, %v182
    %vm185 = vcmask 261120
    %v186 = vsel %vm185, %v184, 0
    %188 = vmatpush.msra.mxu0 0.0
    %189 = vmatpush.msra.mxu0 0.0
    %190 = vmatpush.msra.mxu0 0.0
    %191 = vmatpush.msra.mxu0 0.0
    %192 = vmatpush.msra.mxu0 0.0
    %193 = vmatpush.msra.mxu0 0.0
    %194 = vmatpush.msra.mxu0 0.0
    %195 = vmatpush.msra.mxu0 0.0
    %196 = vmatpush.msra.mxu0 0.0
    %197 = vmatpush.msra.mxu0 0.0
    %198 = vmatpush.msra.mxu0 0.0
    %199 = vmatpush.msra.mxu0 0.0
    %200 = vmatpush.msra.mxu0 %v179
    %201 = vmatpush.msra.mxu0 %v178
    %202 = vmatpush.msra.mxu0 %v177
    %203 = vmatpush.msra.mxu0 %v176
    %204 = vmatmul.f32.gmra.mxu0 %v186
    %v205 = vpop.f32.mrf.mxu0
    %v206 = vadd.f32 0.0, %v205
    %207 = vdwg.mxu0
    %v208 = vrot.slane %v170, 7
    %v209 = vsel %vm183, %v208, %v169
    %v210 = vsel %vm185, %v209, 0
    %212 = vmatpush.msra.mxu0 0.0
    %213 = vmatpush.msra.mxu0 0.0
    %214 = vmatpush.msra.mxu0 0.0
    %215 = vmatpush.msra.mxu0 0.0
    %216 = vmatpush.msra.mxu0 0.0
    %217 = vmatpush.msra.mxu0 0.0
    %218 = vmatpush.msra.mxu0 0.0
    %219 = vmatpush.msra.mxu0 0.0
    %220 = vmatpush.msra.mxu0 0.0
    %221 = vmatpush.msra.mxu0 0.0
    %222 = vmatpush.msra.mxu0 0.0
    %223 = vmatpush.msra.mxu0 0.0
    %224 = vmatpush.msra.mxu0 %v174
    %225 = vmatpush.msra.mxu0 %v173
    %226 = vmatpush.msra.mxu0 %v172
    %227 = vmatpush.msra.mxu0 %v171
    %228 = vmatmul.f32.gmra.mxu0 %v210
    %v229 = vpop.f32.mrf.mxu0
    %v230 = vadd.f32 %v206, %v229
    %231 = vdwg.mxu0
    %s232 = scalar_lea.vmem [#allocation5], 64
    %v233 = vld [vmem:[%s232] sm:$0xff]
    %v234 = vld [vmem:[%s232 + $0x8] sm:$0xff]
    %v235 = vld [vmem:[%s232 + $0x10] sm:$0xff]
    %v236 = vld [vmem:[%s232 + $0x18] sm:$0xff]
    %v237 = vrot.slane %v169, 2
    %v238 = vrot.slane %v170, 1
    %v239 = vsel %vm183, %v238, %v237
    %v240 = vsel %vm185, %v239, 0
    %242 = vmatpush.msra.mxu0 0.0
    %243 = vmatpush.msra.mxu0 0.0
    %244 = vmatpush.msra.mxu0 0.0
    %245 = vmatpush.msra.mxu0 0.0
    %246 = vmatpush.msra.mxu0 0.0
    %247 = vmatpush.msra.mxu0 0.0
    %248 = vmatpush.msra.mxu0 0.0
    %249 = vmatpush.msra.mxu0 0.0
    %250 = vmatpush.msra.mxu0 0.0
    %251 = vmatpush.msra.mxu0 0.0
    %252 = vmatpush.msra.mxu0 0.0
    %253 = vmatpush.msra.mxu0 0.0
    %254 = vmatpush.msra.mxu0 %v236
    %255 = vmatpush.msra.mxu0 %v235
    %256 = vmatpush.msra.mxu0 %v234
    %257 = vmatpush.msra.mxu0 %v233
    %258 = vmatmul.f32.gmra.mxu0 %v240
    %v259 = vpop.f32.mrf.mxu0
    %v260 = vadd.f32 0.0, %v259
    %261 = vdwg.mxu0
    %v262 = vadd.f32 %v230, %v260
    %s263 = scalar_lea.vmem [#allocation5], 96
    %v264 = vld [vmem:[%s263] sm:$0xff]
    %v265 = vld [vmem:[%s263 + $0x8] sm:$0xff]
    %v266 = vld [vmem:[%s263 + $0x10] sm:$0xff]
    %v267 = vld [vmem:[%s263 + $0x18] sm:$0xff]
    %v268 = vrot.slane %v169, 3
    %v269 = vrot.slane %v170, 2
    %v270 = vsel %vm183, %v269, %v268
    %v271 = vsel %vm185, %v270, 0
    %273 = vmatpush.msra.mxu0 0.0
    %274 = vmatpush.msra.mxu0 0.0
    %275 = vmatpush.msra.mxu0 0.0
    %276 = vmatpush.msra.mxu0 0.0
    %277 = vmatpush.msra.mxu0 0.0
    %278 = vmatpush.msra.mxu0 0.0
    %279 = vmatpush.msra.mxu0 0.0
    %280 = vmatpush.msra.mxu0 0.0
    %281 = vmatpush.msra.mxu0 0.0
    %282 = vmatpush.msra.mxu0 0.0
    %283 = vmatpush.msra.mxu0 0.0
    %284 = vmatpush.msra.mxu0 0.0
    %285 = vmatpush.msra.mxu0 %v267
    %286 = vmatpush.msra.mxu0 %v266
    %287 = vmatpush.msra.mxu0 %v265
    %288 = vmatpush.msra.mxu0 %v264
    %289 = vmatmul.f32.gmra.mxu0 %v271
    %v290 = vpop.f32.mrf.mxu0
    %v291 = vadd.f32 0.0, %v290
    %292 = vdwg.mxu0
    %v293 = vadd.f32 %v262, %v291
    %v294 = vmul.f32 %v293, 0.5
    %v295 = vmul.f32 %v293, 0.70710677
    %v296 = vmul.f32 %v295, %v295
    %v297 = vmin.f32 16.0, %v296
    %v298 = vmul.f32 %v297, 2.1237322e-06
    %v299 = vadd.f32 %v298, 0.00028619796
    %v300 = vmul.f32 %v297, %v299
    %v301 = vadd.f32 %v300, 0.0036580483
    %v302 = vmul.f32 %v297, %v301
    %v303 = vadd.f32 %v302, 0.05243302
    %v304 = vmul.f32 %v297, %v303
    %v305 = vadd.f32 %v304, 0.18741608
    %v306 = vmul.f32 %v297, %v305
    %v307 = vadd.f32 %v306, 1.1283791
    %v308 = vmul.f32 %v295, %v307
    %v309 = vmul.f32 %v297, 3.8918573e-05
    %v310 = vadd.f32 %v309, 0.001143296
    %v311 = vmul.f32 %v297, %v310
    %v312 = vadd.f32 %v311, 0.014752088
    %v313 = vmul.f32 %v297, %v312
    %v314 = vadd.f32 %v313, 0.112945676
    %v315 = vmul.f32 %v297, %v314
    %v316 = vadd.f32 %v315, 0.4994258
    %v317 = vmul.f32 %v297, %v316
    %v318 = vadd.f32 %v317, 1.0
    %v319 = vrcp.pop %v318
    %v320 = vmul.f32 %v318, %v319
    %v321 = vsub.f32 1.0, %v320
    %v322 = vmul.f32 %v319, %v321
    %v323 = vadd.f32 %v319, %v322
    %vm324 = vweird.f32 %v318
    %vm325 = vweird.f32 %v319
    %vm326 = vmor %vm324, %vm325
    %v327 = vsel %vm326, %v319, %v323
    %v328 = vand.u32 2147483647, %v318
    %vm329 = vcmp.eq.f32.partialorder %v328, 8.507059e+37
    %v330 = vand.u32 %v318, 2147483648
    %v331 = vor.u32 1.1754944e-38, %v330
    %v332 = vsel %vm329, %v331, %v327
    %v333 = vmul.f32 %v308, %v332
    %v334 = vmin.f32 %v333, 1.0
    %v335 = vmax.f32 %v334, -1.0
    %v336 = vadd.f32 %v335, 1.0
    %v337 = vmul.f32 %v294, %v336
    %v338 = vmul.f32 %v337, 0.5
    %v339 = vmul.f32 %v337, 0.70710677
    %v340 = vmul.f32 %v339, %v339
    %v341 = vmin.f32 16.0, %v340
    %v342 = vmul.f32 %v341, 2.1237322e-06
    %v343 = vadd.f32 %v342, 0.00028619796
    %v344 = vmul.f32 %v341, %v343
    %v345 = vadd.f32 %v344, 0.0036580483
    %v346 = vmul.f32 %v341, %v345
    %v347 = vadd.f32 %v346, 0.05243302
    %v348 = vmul.f32 %v341, %v347
    %v349 = vadd.f32 %v348, 0.18741608
    %v350 = vmul.f32 %v341, %v349
    %v351 = vadd.f32 %v350, 1.1283791
    %v352 = vmul.f32 %v339, %v351
    %v353 = vmul.f32 %v341, 3.8918573e-05
    %v354 = vadd.f32 %v353, 0.001143296
    %v355 = vmul.f32 %v341, %v354
    %v356 = vadd.f32 %v355, 0.014752088
    %v357 = vmul.f32 %v341, %v356
    %v358 = vadd.f32 %v357, 0.112945676
    %v359 = vmul.f32 %v341, %v358
    %v360 = vadd.f32 %v359, 0.4994258
    %v361 = vmul.f32 %v341, %v360
    %v362 = vadd.f32 %v361, 1.0
    %v363 = vrcp.pop %v362
    %v364 = vmul.f32 %v362, %v363
    %v365 = vsub.f32 1.0, %v364
    %v366 = vmul.f32 %v363, %v365
    %v367 = vadd.f32 %v363, %v366
    %vm368 = vweird.f32 %v362
    %vm369 = vweird.f32 %v363
    %vm370 = vmor %vm368, %vm369
    %v371 = vsel %vm370, %v363, %v367
    %v372 = vand.u32 2147483647, %v362
    %vm373 = vcmp.eq.f32.partialorder %v372, 8.507059e+37
    %v374 = vand.u32 %v362, 2147483648
    %v375 = vor.u32 1.1754944e-38, %v374
    %v376 = vsel %vm373, %v375, %v371
    %v377 = vmul.f32 %v352, %v376
    %v378 = vmin.f32 %v377, 1.0
    %v379 = vmax.f32 %v378, -1.0
    %v380 = vadd.f32 %v379, 1.0
    %v381 = vmul.f32 %v338, %v380
    %v382 = vld [vmem:[#allocation7] sm:$0xff]
    %v383 = vld [vmem:[#allocation7 + $0x8] sm:$0xff]
    %v384 = vld [vmem:[#allocation7 + $0x10] sm:$0xff]
    %v385 = vld [vmem:[#allocation7 + $0x18] sm:$0xff]
    %v387 = vsel %vm185, %v381, 0
    %389 = vmatpush.msra.mxu0 0.0
    %390 = vmatpush.msra.mxu0 0.0
    %391 = vmatpush.msra.mxu0 0.0
    %392 = vmatpush.msra.mxu0 0.0
    %393 = vmatpush.msra.mxu0 0.0
    %394 = vmatpush.msra.mxu0 0.0
    %395 = vmatpush.msra.mxu0 0.0
    %396 = vmatpush.msra.mxu0 0.0
    %397 = vmatpush.msra.mxu0 0.0
    %398 = vmatpush.msra.mxu0 0.0
    %399 = vmatpush.msra.mxu0 0.0
    %400 = vmatpush.msra.mxu0 0.0
    %401 = vmatpush.msra.mxu0 %v385
    %402 = vmatpush.msra.mxu0 %v384
    %403 = vmatpush.msra.mxu0 %v383
    %404 = vmatpush.msra.mxu0 %v382
    %405 = vmatmul.f32.gmra.mxu0 %v387
    %v406 = vpop.f32.mrf.mxu0
    %v407 = vadd.f32 0.0, %v406
    %408 = vdwg.mxu0
    %s409 = sld [smem:[#allocation10]]
    %v410 = vstv %s409
    %v411 = vmul.f32 %v407, %v410
    %v412 = vld [vmem:[#allocation8] sm:$0xff]
    %v413 = vld [vmem:[#allocation8 + $0x8] sm:$0xff]
    %s414 = scalar_lea.vmem [#allocation8], 16
    %v415 = vld [vmem:[%s414] sm:$0xff]
    %v416 = vld [vmem:[%s414 + $0x8] sm:$0xff]
    %417 = vrot.lane.b32.xlu0 %v381, 112
    %v418 = vpop.permute.xlu0 %417
    %vm419 = vcmask 130048
    %v420 = vsel %vm419, %v418, 0
    %422 = vmatpush.msra.mxu0 0.0
    %423 = vmatpush.msra.mxu0 0.0
    %424 = vmatpush.msra.mxu0 0.0
    %425 = vmatpush.msra.mxu0 0.0
    %426 = vmatpush.msra.mxu0 0.0
    %427 = vmatpush.msra.mxu0 0.0
    %428 = vmatpush.msra.mxu0 0.0
    %429 = vmatpush.msra.mxu0 0.0
    %430 = vmatpush.msra.mxu0 0.0
    %431 = vmatpush.msra.mxu0 0.0
    %432 = vmatpush.msra.mxu0 0.0
    %433 = vmatpush.msra.mxu0 0.0
    %434 = vmatpush.msra.mxu0 0.0
    %435 = vmatpush.msra.mxu0 0.0
    %436 = vmatpush.msra.mxu0 %v416
    %437 = vmatpush.msra.mxu0 %v415
    %438 = vmatmul.f32.gmra.mxu0 %v420
    %v439 = vpop.f32.mrf.mxu0
    %v440 = vadd.f32 0.0, %v439
    %441 = vdwg.mxu0
    %v442 = vsel %vm419, %v381, 0
    %444 = vmatpush.msra.mxu0 0.0
    %445 = vmatpush.msra.mxu0 0.0
    %446 = vmatpush.msra.mxu0 0.0
    %447 = vmatpush.msra.mxu0 0.0
    %448 = vmatpush.msra.mxu0 0.0
    %449 = vmatpush.msra.mxu0 0.0
    %450 = vmatpush.msra.mxu0 0.0
    %451 = vmatpush.msra.mxu0 0.0
    %452 = vmatpush.msra.mxu0 0.0
    %453 = vmatpush.msra.mxu0 0.0
    %454 = vmatpush.msra.mxu0 0.0
    %455 = vmatpush.msra.mxu0 0.0
    %456 = vmatpush.msra.mxu0 0.0
    %457 = vmatpush.msra.mxu0 0.0
    %458 = vmatpush.msra.mxu0 %v413
    %459 = vmatpush.msra.mxu0 %v412
    %460 = vmatmul.f32.gmra.mxu0 %v442
    %v461 = vpop.f32.mrf.mxu0
    %v462 = vadd.f32 %v440, %v461
    %463 = vdwg.mxu0
    %v464 = vmul.f32 %v462, 0.5
    %v465 = vmul.f32 %v462, 0.70710677
    %v466 = vmul.f32 %v465, %v465
    %v467 = vmin.f32 16.0, %v466
    %v468 = vmul.f32 %v467, 2.1237322e-06
    %v469 = vadd.f32 %v468, 0.00028619796
    %v470 = vmul.f32 %v467, %v469
    %v471 = vadd.f32 %v470, 0.0036580483
    %v472 = vmul.f32 %v467, %v471
    %v473 = vadd.f32 %v472, 0.05243302
    %v474 = vmul.f32 %v467, %v473
    %v475 = vadd.f32 %v474, 0.18741608
    %v476 = vmul.f32 %v467, %v475
    %v477 = vadd.f32 %v476, 1.1283791
    %v478 = vmul.f32 %v465, %v477
    %v479 = vmul.f32 %v467, 3.8918573e-05
    %v480 = vadd.f32 %v479, 0.001143296
    %v481 = vmul.f32 %v467, %v480
    %v482 = vadd.f32 %v481, 0.014752088
    %v483 = vmul.f32 %v467, %v482
    %v484 = vadd.f32 %v483, 0.112945676
    %v485 = vmul.f32 %v467, %v484
    %v486 = vadd.f32 %v485, 0.4994258
    %v487 = vmul.f32 %v467, %v486
    %v488 = vadd.f32 %v487, 1.0
    %v489 = vrcp.pop %v488
    %v490 = vmul.f32 %v488, %v489
    %v491 = vsub.f32 1.0, %v490
    %v492 = vmul.f32 %v489, %v491
    %v493 = vadd.f32 %v489, %v492
    %vm494 = vweird.f32 %v488
    %vm495 = vweird.f32 %v489
    %vm496 = vmor %vm494, %vm495
    %v497 = vsel %vm496, %v489, %v493
    %v498 = vand.u32 2147483647, %v488
    %vm499 = vcmp.eq.f32.partialorder %v498, 8.507059e+37
    %v500 = vand.u32 %v488, 2147483648
    %v501 = vor.u32 1.1754944e-38, %v500
    %v502 = vsel %vm499, %v501, %v497
    %v503 = vmul.f32 %v478, %v502
    %v504 = vmin.f32 %v503, 1.0
    %v505 = vmax.f32 %v504, -1.0
    %v506 = vadd.f32 %v505, 1.0
    %v507 = vmul.f32 %v464, %v506
    %v508 = vmul.f32 %v507, 0.5
    %v509 = vmul.f32 %v507, 0.70710677
    %v510 = vmul.f32 %v509, %v509
    %v511 = vmin.f32 16.0, %v510
    %v512 = vmul.f32 %v511, 2.1237322e-06
    %v513 = vadd.f32 %v512, 0.00028619796
    %v514 = vmul.f32 %v511, %v513
    %v515 = vadd.f32 %v514, 0.0036580483
    %v516 = vmul.f32 %v511, %v515
    %v517 = vadd.f32 %v516, 0.05243302
    %v518 = vmul.f32 %v511, %v517
    %v519 = vadd.f32 %v518, 0.18741608
    %v520 = vmul.f32 %v511, %v519
    %v521 = vadd.f32 %v520, 1.1283791
    %v522 = vmul.f32 %v509, %v521
    %v523 = vmul.f32 %v511, 3.8918573e-05
    %v524 = vadd.f32 %v523, 0.001143296
    %v525 = vmul.f32 %v511, %v524
    %v526 = vadd.f32 %v525, 0.014752088
    %v527 = vmul.f32 %v511, %v526
    %v528 = vadd.f32 %v527, 0.112945676
    %v529 = vmul.f32 %v511, %v528
    %v530 = vadd.f32 %v529, 0.4994258
    %v531 = vmul.f32 %v511, %v530
    %v532 = vadd.f32 %v531, 1.0
    %v533 = vrcp.pop %v532
    %v534 = vmul.f32 %v532, %v533
    %v535 = vsub.f32 1.0, %v534
    %v536 = vmul.f32 %v533, %v535
    %v537 = vadd.f32 %v533, %v536
    %vm538 = vweird.f32 %v532
    %vm539 = vweird.f32 %v533
    %vm540 = vmor %vm538, %vm539
    %v541 = vsel %vm540, %v533, %v537
    %v542 = vand.u32 2147483647, %v532
    %vm543 = vcmp.eq.f32.partialorder %v542, 8.507059e+37
    %v544 = vand.u32 %v532, 2147483648
    %v545 = vor.u32 1.1754944e-38, %v544
    %v546 = vsel %vm543, %v545, %v541
    %v547 = vmul.f32 %v522, %v546
    %v548 = vmin.f32 %v547, 1.0
    %v549 = vmax.f32 %v548, -1.0
    %v550 = vadd.f32 %v549, 1.0
    %v551 = vmul.f32 %v508, %v550
    %v552 = vld [vmem:[%s6] sm:$0xff]
    %vm553 = vcmask 64512
    %v555 = vsel %vm553, %v551, 0
    %557 = vmatpush.msra.mxu0 0.0
    %558 = vmatpush.msra.mxu0 0.0
    %559 = vmatpush.msra.mxu0 0.0
    %560 = vmatpush.msra.mxu0 0.0
    %561 = vmatpush.msra.mxu0 0.0
    %562 = vmatpush.msra.mxu0 0.0
    %563 = vmatpush.msra.mxu0 0.0
    %564 = vmatpush.msra.mxu0 0.0
    %565 = vmatpush.msra.mxu0 0.0
    %566 = vmatpush.msra.mxu0 0.0
    %567 = vmatpush.msra.mxu0 0.0
    %568 = vmatpush.msra.mxu0 0.0
    %569 = vmatpush.msra.mxu0 0.0
    %570 = vmatpush.msra.mxu0 0.0
    %571 = vmatpush.msra.mxu0 0.0
    %572 = vmatpush.msra.mxu0 %v552
    %573 = vmatmul.f32.gmra.mxu0 %v555
    %v574 = vpop.f32.mrf.mxu0
    %v575 = vadd.f32 0.0, %v574
    %576 = vdwg.mxu0
    %s577 = sld [smem:[#allocation10 + $0x1]]
    %v578 = vstv %s577
    %v579 = vmul.f32 %v575, %v578
    %v580 = vadd.f32 %v411, %v579
    %581 = vst [vmem:[%s8] sm:$0x3] %v580
    // Predicated region
    $region54: #{forward.1} parent=1 // pred_check
      _
    $region55: #{forward.1} parent=1 // pred_check_branch
      %583 = sbr.rel (0) target = $region57
    $region56: #{forward.1} parent=1 // pred_region
      _
    $region57: #{forward.1} parent=1 // pred_fallthru
      _
    // Predicated region
    $region58: #{forward.1} parent=1 // pred_check
      _
    $region59: #{forward.1} parent=1 // pred_check_branch
      %585 = sbr.rel (0) target = $region61
    $region60: #{forward.1} parent=1 // pred_region
      _
    $region61: #{forward.1} parent=1 // pred_fallthru
      _
    %586 = vsyncpa [#allocation3], 1
    %587 = vsyncpa [#allocation6], 1
    %588 = vsyncpa [#allocation9], 1
    %589 = vsyncpa [#allocation4], 1

</llo_original>
